<compile_context>
chip_gen: v6e
topology: v6e:2x2x1
jax: 0.10.0
libtpu: 0.0.40
codegen_flags: <defaults>
</compile_context>

<pallas_src>
import jax
import jax.numpy as jnp
from jax.experimental import pallas as pl
from jax.experimental.pallas import tpu as pltpu


def _round_up(n: int, m: int) -> int:
    return ((n + m - 1) // m) * m


def ffn_kernel(x_ref, w2_ref, b2_ref, o_ref):
    # output = x @ w2 + b2  (linear_2 applied to the ORIGINAL input, exactly
    # matching the PyTorch forward, which overwrites the relu(linear_1(x))
    # result).  The dead linear_1 path is intentionally not computed.
    y = jnp.dot(x_ref[...], w2_ref[...], preferred_element_type=jnp.float32)
    o_ref[...] = (y + b2_ref[...]).astype(o_ref.dtype)


def position_wise_feed_forward(x, w1, b1, w2, b2, *, row_tile_max=512):
    """x: (B, S, d_model); w1: (d_model, d_ff); w2: (d_ff, d_model).

    w1/b1 are accepted to mirror the module's parameters but are unused
    because the reference forward discards the linear_1 branch.
    """
    del w1, b1  # dead in the reference forward; no DMA, no VMEM residency.

    B, S, D = x.shape
    d_ff, d_out = w2.shape
    assert D == d_ff, "reference forward applies linear_2 directly to x"

    M = B * S
    x2 = x.reshape(M, D)

    # Row tile: multiple of 8 sublanes (f32), capped at row_tile_max.
    row_tile = min(row_tile_max, _round_up(M, 8))
    m_pad = _round_up(M, row_tile)
    if m_pad != M:
        x2 = jnp.pad(x2, ((0, m_pad - M), (0, 0)))

    grid = (m_pad // row_tile,)

    # TODO(synk): for large d_model/d_ff on v7x (64 MiB VMEM), add N/K tiling
    # with an f32 accumulator in scratch and bias-add on the final K step; for
    # production shapes prefer bf16 x/w2 (keep f32 accumulation) to hit the
    # bf16 MXU rate.  Not needed at these small f32 shapes.
    out = pl.pallas_call(
        ffn_kernel,
        out_shape=jax.ShapeDtypeStruct((m_pad, d_out), x.dtype),
        grid=grid,
        in_specs=[
            # Activations: one (row_tile, D) tile per grid step (pipelined).
            pl.BlockSpec((row_tile, D), lambda i: (i, 0)),
            # Weight + bias: constant index_map -> VMEM-resident across grid.
            pl.BlockSpec((d_ff, d_out), lambda i: (0, 0)),
            pl.BlockSpec((1, d_out), lambda i: (0, 0)),
        ],
        out_specs=pl.BlockSpec((row_tile, d_out), lambda i: (i, 0)),
        compiler_params=pltpu.CompilerParams(
            # Row tiles are independent -> shard across TensorCores on v7x.
            dimension_semantics=("parallel",),
        ),
    )(x2, w2, b2)

    if m_pad != M:
        out = out[:M]
    return out.reshape(B, S, d_out)


if __name__ == "__main__":
    # Small shapes: batch=2, seq=8, d_model=d_ff=128 (d_ff must equal d_model
    # for the reference forward, which applies linear_2 directly to x).
    B, S, d_model, d_ff = 2, 8, 128, 128

    key = jax.random.PRNGKey(0)
    kx, k1, kb1, k2, kb2 = jax.random.split(key, 5)

    x = jax.random.normal(kx, (B, S, d_model), dtype=jnp.float32)
    # nn.Linear(d_model, d_ff): weight (d_ff, d_model) -> store transposed.
    w1 = jax.random.normal(k1, (d_model, d_ff), dtype=jnp.float32) * 0.02
    b1 = jax.random.normal(kb1, (1, d_ff), dtype=jnp.float32) * 0.02
    # nn.Linear(d_ff, d_model): weight (d_model, d_ff) -> store transposed.
    w2 = jax.random.normal(k2, (d_ff, d_model), dtype=jnp.float32) * 0.02
    b2 = jax.random.normal(kb2, (1, d_model), dtype=jnp.float32) * 0.02

    out = position_wise_feed_forward(x, w1, b1, w2, b2)
    out = jax.block_until_ready(out)

    # Reference (pure JAX) check of exact module semantics: out == linear_2(x).
    ref = jnp.einsum("bsd,df->bsf", x, w2) + b2[0]
    assert out.shape == (B, S, d_model)
    assert jnp.allclose(out, ref, atol=1e-4, rtol=1e-4)

    print("KERNEL_OK")
</pallas_src>

<mosaic_0001>
module attributes {stable_mosaic.version = 11 : i64} {
  func.func @ffn_kernel(%arg0: i32, %arg1: memref<16x128xf32, #tpu.memory_space<vmem>>, %arg2: memref<128x128xf32, #tpu.memory_space<vmem>>, %arg3: memref<1x128xf32, #tpu.memory_space<vmem>>, %arg4: memref<16x128xf32, #tpu.memory_space<vmem>>) attributes {dimension_semantics = [#tpu.dimension_semantics<parallel>], iteration_bounds = array<i64: 1>, scalar_prefetch = 0 : i64, scratch_operands = 0 : i64, tpu.core_type = #tpu.core_type<tc>, window_params = [{transform_indices = @transform_0, window_bounds = array<i64: 16, 128>}, {pipeline_mode = #tpu.pipeline_mode<synchronous>, transform_indices = @transform_1, window_bounds = array<i64: 128, 128>}, {pipeline_mode = #tpu.pipeline_mode<synchronous>, transform_indices = @transform_2, window_bounds = array<i64: 1, 128>}, {transform_indices = @transform_3, window_bounds = array<i64: 16, 128>}]} {
    %c0 = arith.constant 0 : index
    %c0_0 = arith.constant 0 : index
    %0 = vector.load %arg1[%c0, %c0_0] : memref<16x128xf32, #tpu.memory_space<vmem>>, vector<16x128xf32>
    %c0_1 = arith.constant 0 : index
    %c0_2 = arith.constant 0 : index
    %1 = vector.load %arg2[%c0_1, %c0_2] : memref<128x128xf32, #tpu.memory_space<vmem>>, vector<128x128xf32>
    %cst = arith.constant dense<0.000000e+00> : vector<16x128xf32>
    %2 = tpu.matmul %0, %1, %cst {dimension_numbers = #tpu.dot_dimension_numbers<[1], [0], [0], [1], [0, 0, 1, 1], [], []>} : vector<16x128xf32>, vector<128x128xf32>, vector<16x128xf32> -> vector<16x128xf32>
    %c0_3 = arith.constant 0 : index
    %c0_4 = arith.constant 0 : index
    %3 = vector.load %arg3[%c0_3, %c0_4] : memref<1x128xf32, #tpu.memory_space<vmem>>, vector<1x128xf32>
    %4 = vector.broadcast %3 : vector<1x128xf32> to vector<16x128xf32>
    %5 = arith.addf %2, %4 : vector<16x128xf32>
    %c0_5 = arith.constant 0 : index
    %c0_6 = arith.constant 0 : index
    %6 = vector.load %arg4[%c0_5, %c0_6] : memref<16x128xf32, #tpu.memory_space<vmem>>, vector<16x128xf32>
    tpu.vector_store %arg4[%c0_5, %c0_6], %5 {strides = array<i32>} : memref<16x128xf32, #tpu.memory_space<vmem>>, vector<16x128xf32>,
    return
  }
  func.func @transform_0(%arg0: i32) -> (i32, i32) {
    %c0_i32 = arith.constant 0 : i32
    %c0_i32_0 = arith.constant 0 : i32
    return %arg0, %c0_i32 : i32, i32
  }
  func.func @transform_1(%arg0: i32) -> (i32, i32) {
    %c0_i32 = arith.constant 0 : i32
    %c0_i32_0 = arith.constant 0 : i32
    %c0_i32_1 = arith.constant 0 : i32
    return %c0_i32, %c0_i32_0 : i32, i32
  }
  func.func @transform_2(%arg0: i32) -> (i32, i32) {
    %c0_i32 = arith.constant 0 : i32
    %c0_i32_0 = arith.constant 0 : i32
    %c0_i32_1 = arith.constant 0 : i32
    return %c0_i32, %c0_i32_0 : i32, i32
  }
  func.func @transform_3(%arg0: i32) -> (i32, i32) {
    %c0_i32 = arith.constant 0 : i32
    %c0_i32_0 = arith.constant 0 : i32
    return %arg0, %c0_i32 : i32, i32
  }
}

</mosaic_0001>

<llo_original>
// kernel: tpu_custom_call.1
$region0: #{tpu_custom_call.1}
  #allocation0 [shape = 'u32[]', space=smem, size = 0x4, offset = 0x4, fixed_abs, tag = 'smem constant byte address 0x4 - core index']
  #allocation1 [shape = 'u32[144,128]{1,0:T(1,128)}', space=vmem, size = 0x12000, scoped, tag = 'internal scratch']
  %s0 = inlined_call_operand.hbm [shape: f32[16,128], index: 0, kind: input, shape index: {}]
  %s1 = inlined_call_operand.hbm [shape: f32[128,128], index: 1, kind: input, shape index: {}]
  %s2 = inlined_call_operand.vmem [shape: f32[1,128], index: 2, kind: input, shape index: {}]
  %s3 = inlined_call_operand.hbm [shape: f32[16,128], index: 3, kind: output, shape index: {}]
  %s4 = sld [smem:[#allocation0]]
  $region30: #{tpu_custom_call.1} parent=0
    _
  %s6 = ssub.s32 1, %s4
  %s7 = scalar_select 0, %s6, %s4
  $region1: #{tpu_custom_call.1} parent=0
    #allocation2 [shape = 'u8[8192]{0}', space=vmem, size = 0x2000, scoped, tag = 'input window, operand 0, single buffered']
    #allocation3 [shape = 's32[1]{0}', space=sflag, size = 0x4, scoped, tag = 'scoped memory for tpu_custom_call.1']
    #allocation4 [shape = 's32[1]{0}', space=sflag, size = 0x4, scoped, tag = 'scoped memory for tpu_custom_call.1']
    #allocation5 [shape = 'u8[65536]{0}', space=vmem, size = 0x10000, scoped, tag = 'input window, operand 1, single buffered']
    #allocation6 [shape = 's32[1]{0}', space=sflag, size = 0x4, scoped, tag = 'scoped memory for tpu_custom_call.1']
    #allocation7 [shape = 'u8[8192]{0}', space=vmem, size = 0x2000, scoped, tag = 'output window, operand 0, single buffered']
    %8 = vsyncpa [#allocation3], 0
    %9 = vsyncpa [#allocation6], 0
    %10 = vsyncpa [#allocation4], 0
    // Predicated region
    $region2: #{tpu_custom_call.1} parent=1 // pred_check
      _
    $region3: #{tpu_custom_call.1} parent=1 // pred_check_branch
      %12 = sbr.rel (0) target = $region5
    $region4: #{tpu_custom_call.1} parent=1 // pred_region
      %s14 = ssub.s32 256, 256
      %15 = vsyncadd [#allocation3], %s14
      %s16 = sshll.u32 [#allocation2], 4
      %s17 = int_to_ptr.vmem [resolvable:$true] %s16
      %22 = dma.hbm_to_vmem [thread:$0]  %s0, 256, %s17, [#allocation3], 128, 128, 8
    $region5: #{tpu_custom_call.1} parent=1 // pred_fallthru
      _
    // Predicated region
    $region6: #{tpu_custom_call.1} parent=1 // pred_check
      _
    $region7: #{tpu_custom_call.1} parent=1 // pred_check_branch
      %24 = sbr.rel (0) target = $region9
    $region8: #{tpu_custom_call.1} parent=1 // pred_region
      %s26 = ssub.s32 2048, 2048
      %27 = vsyncadd [#allocation6], %s26
      %s28 = sshll.u32 [#allocation5], 4
      %s29 = int_to_ptr.vmem [resolvable:$true] %s28
      %34 = dma.hbm_to_vmem [thread:$0]  %s1, 2048, %s29, [#allocation6], 128, 128, 8
    $region9: #{tpu_custom_call.1} parent=1 // pred_fallthru
      _
    // Predicated region
    $region10: #{tpu_custom_call.1} parent=1 // pred_check
      _
    $region11: #{tpu_custom_call.1} parent=1 // pred_check_branch
      %36 = sbr.rel (0) target = $region13
    $region12: #{tpu_custom_call.1} parent=1 // pred_region
      _
    $region13: #{tpu_custom_call.1} parent=1 // pred_fallthru
      _
    // Predicated region
    $region14: #{tpu_custom_call.1} parent=1 // pred_check
      _
    $region15: #{tpu_custom_call.1} parent=1 // pred_check_branch
      %38 = sbr.rel (0) target = $region17
    $region16: #{tpu_custom_call.1} parent=1 // pred_region
      %39 = dma.done [#allocation3], 256
    $region17: #{tpu_custom_call.1} parent=1 // pred_fallthru
      _
    // Predicated region
    $region18: #{tpu_custom_call.1} parent=1 // pred_check
      _
    $region19: #{tpu_custom_call.1} parent=1 // pred_check_branch
      %41 = sbr.rel (0) target = $region21
    $region20: #{tpu_custom_call.1} parent=1 // pred_region
      %42 = dma.done [#allocation6], 2048
    $region21: #{tpu_custom_call.1} parent=1 // pred_fallthru
      _
    %v43 = vld [vmem:[#allocation2] sm:$0xff]
    %v44 = vld [vmem:[#allocation2 + $0x8] sm:$0xff]
    %v45 = vld [vmem:[#allocation5] sm:$0xff]
    %v46 = vld [vmem:[#allocation5 + $0x8] sm:$0xff]
    %v47 = vld [vmem:[#allocation5 + $0x10] sm:$0xff]
    %v48 = vld [vmem:[#allocation5 + $0x18] sm:$0xff]
    %v49 = vld [vmem:[#allocation5 + $0x20] sm:$0xff]
    %v50 = vld [vmem:[#allocation5 + $0x28] sm:$0xff]
    %v51 = vld [vmem:[#allocation5 + $0x30] sm:$0xff]
    %v52 = vld [vmem:[#allocation5 + $0x38] sm:$0xff]
    %v53 = vld [vmem:[#allocation5 + $0x40] sm:$0xff]
    %v54 = vld [vmem:[#allocation5 + $0x48] sm:$0xff]
    %v55 = vld [vmem:[#allocation5 + $0x50] sm:$0xff]
    %v56 = vld [vmem:[#allocation5 + $0x58] sm:$0xff]
    %v57 = vld [vmem:[#allocation5 + $0x60] sm:$0xff]
    %v58 = vld [vmem:[#allocation5 + $0x68] sm:$0xff]
    %v59 = vld [vmem:[#allocation5 + $0x70] sm:$0xff]
    %v60 = vld [vmem:[#allocation5 + $0x78] sm:$0xff]
    %v61 = vld [vmem:[%s2] sm:$0x1]
    %v63 = vlaneseq
    %v64 = vshrl.u32 %v63, 7
    %v65 = vsub.s32 0, %v64
    %v66 = vrot.slane %v61, %v65
    %68 = vmatprep.subr.mxu0 0.0
    %69 = vmatpush1.msra.mxu0 %v60
    %70 = vmatprep.subr.mxu0 0.0
    %71 = vmatpush1.msra.mxu0 %v59
    %72 = vmatprep.subr.mxu0 0.0
    %73 = vmatpush1.msra.mxu0 %v58
    %74 = vmatprep.subr.mxu0 0.0
    %75 = vmatpush1.msra.mxu0 %v57
    %76 = vmatprep.subr.mxu0 0.0
    %77 = vmatpush1.msra.mxu0 %v56
    %78 = vmatprep.subr.mxu0 0.0
    %79 = vmatpush1.msra.mxu0 %v55
    %80 = vmatprep.subr.mxu0 0.0
    %81 = vmatpush1.msra.mxu0 %v54
    %82 = vmatprep.subr.mxu0 0.0
    %83 = vmatpush1.msra.mxu0 %v53
    %84 = vmatprep.subr.mxu0 0.0
    %85 = vmatpush1.msra.mxu0 %v52
    %86 = vmatprep.subr.mxu0 0.0
    %87 = vmatpush1.msra.mxu0 %v51
    %88 = vmatprep.subr.mxu0 0.0
    %89 = vmatpush1.msra.mxu0 %v50
    %90 = vmatprep.subr.mxu0 0.0
    %91 = vmatpush1.msra.mxu0 %v49
    %92 = vmatprep.subr.mxu0 0.0
    %93 = vmatpush1.msra.mxu0 %v48
    %94 = vmatprep.subr.mxu0 0.0
    %95 = vmatpush1.msra.mxu0 %v47
    %96 = vmatprep.subr.mxu0 0.0
    %97 = vmatpush1.msra.mxu0 %v46
    %98 = vmatprep.subr.mxu0 0.0
    %99 = vmatpush1.msra.mxu0 %v45
    %100 = vmatprep.subr.mxu0 0.0
    %101 = vmatpush2.msra.mxu0 0.0
    %102 = vmatprep.subr.mxu0 0.0
    %103 = vmatpush2.msra.mxu0 0.0
    %104 = vmatprep.subr.mxu0 0.0
    %105 = vmatpush2.msra.mxu0 0.0
    %106 = vmatprep.subr.mxu0 0.0
    %107 = vmatpush2.msra.mxu0 0.0
    %108 = vmatprep.subr.mxu0 0.0
    %109 = vmatpush2.msra.mxu0 0.0
    %110 = vmatprep.subr.mxu0 0.0
    %111 = vmatpush2.msra.mxu0 0.0
    %112 = vmatprep.subr.mxu0 0.0
    %113 = vmatpush2.msra.mxu0 0.0
    %114 = vmatprep.subr.mxu0 0.0
    %115 = vmatpush2.msra.mxu0 0.0
    %116 = vmatprep.subr.mxu0 0.0
    %117 = vmatpush2.msra.mxu0 0.0
    %118 = vmatprep.subr.mxu0 0.0
    %119 = vmatpush2.msra.mxu0 0.0
    %120 = vmatprep.subr.mxu0 0.0
    %121 = vmatpush2.msra.mxu0 0.0
    %122 = vmatprep.subr.mxu0 0.0
    %123 = vmatpush2.msra.mxu0 0.0
    %124 = vmatprep.subr.mxu0 0.0
    %125 = vmatpush2.msra.mxu0 0.0
    %126 = vmatprep.subr.mxu0 0.0
    %127 = vmatpush2.msra.mxu0 0.0
    %128 = vmatprep.subr.mxu0 0.0
    %129 = vmatpush2.msra.mxu0 0.0
    %130 = vmatprep.subr.mxu0 0.0
    %131 = vmatpush2.msra.mxu0 0.0
    %132 = vmatprep.mubr.f32.mxu0 0.0
    %133 = vmatmul.mubr.f32.gmra.mxu0 %v43
    %v134 = vpop.f32.mrf.mxu0
    %v135 = vadd.f32 %v66, %v134
    %v136 = vpop.f32.mrf.mxu0
    %137 = vmatprep.mubr.f32.mxu0 0.0
    %138 = vmatmul.mubr.f32.gmra.mxu0 %v44
    %v139 = vpop.f32.mrf.mxu0
    %v140 = vadd.f32 %v66, %v139
    %v141 = vpop.f32.mrf.mxu0
    %142 = vdwg.mxu0
    %143 = vst [vmem:[#allocation7] sm:$0xff] %v135
    %144 = vst [vmem:[#allocation7 + $0x8] sm:$0xff] %v140
    // Predicated region
    $region22: #{tpu_custom_call.1} parent=1 // pred_check
      _
    $region23: #{tpu_custom_call.1} parent=1 // pred_check_branch
      %146 = sbr.rel (0) target = $region25
    $region24: #{tpu_custom_call.1} parent=1 // pred_region
      %s148 = ssub.s32 256, 256
      %149 = vsyncadd [#allocation4], %s148
      %s150 = sshll.u32 [#allocation7], 4
      %s151 = int_to_ptr.vmem [resolvable:$true] %s150
      %156 = dma.vmem_to_hbm [thread:$0]  %s151, 256, %s3, [#allocation4], 128, 128, 8
    $region25: #{tpu_custom_call.1} parent=1 // pred_fallthru
      _
    // Predicated region
    $region26: #{tpu_custom_call.1} parent=1 // pred_check
      _
    $region27: #{tpu_custom_call.1} parent=1 // pred_check_branch
      %158 = sbr.rel (0) target = $region29
    $region28: #{tpu_custom_call.1} parent=1 // pred_region
      %159 = dma.done [#allocation4], 256
    $region29: #{tpu_custom_call.1} parent=1 // pred_fallthru
      _
    %160 = vsyncpa [#allocation3], 1
    %161 = vsyncpa [#allocation6], 1
    %162 = vsyncpa [#allocation4], 1

</llo_original>
